<compile_context>
chip_gen: v6e
topology: v6e:2x2x1
jax: 0.10.0
libtpu: 0.0.40
codegen_flags: <defaults>
</compile_context>

<pallas_src>
import jax
import jax.numpy as jnp
from jax.experimental import pallas as pl
from jax.experimental.pallas import tpu as pltpu


def attention_kernel(x_ref, w_ref, b_ref, v_ref, o_ref):
    # x_ref: (TB, S, H) block of lstm_output for TB batch rows
    # w_ref: (H, H)     Linear weight, torch (out, in) layout
    # b_ref: (1, H)     Linear bias (f32)
    # v_ref: (1, H)     attention vector (f32)
    # o_ref: (TB, H)    context vectors (f32)
    tb, s, h = x_ref.shape

    # One MXU matmul for the whole block: (TB*S, H) @ W^T (+ bias), then tanh.
    # dot_general contracts the last dim of both operands, so the torch-layout
    # (out, in) weight is consumed directly -- no transpose inside or outside.
    # This read of x is dead after the matmul (x is re-read below), so the
    # compiler does not have to keep a TB*S*H activation live across softmax.
    scores = jax.lax.dot_general(
        x_ref[...].reshape(tb * s, h), w_ref[...],
        dimension_numbers=(((1,), (1,)), ((), ())),
        preferred_element_type=jnp.float32,
    )
    scores = jnp.tanh(scores + b_ref[...])                      # (TB*S, H) f32

    # logits[b, s] = scores[b, s, :] . v -- VPU multiply + lane (XLU) reduce;
    # deliberately NOT an N=1 MXU matvec (would waste the systolic array).
    logits = jnp.sum(scores.reshape(tb, s, h) * v_ref[...], axis=-1)  # (TB, S)

    # Softmax over the sequence axis (torch dim=1), rows fully independent.
    m = jnp.max(logits, axis=-1, keepdims=True)                 # (TB, 1)
    e = jnp.exp(logits - m)                                     # (TB, S)
    denom = jnp.sum(e, axis=-1, keepdims=True)                  # (TB, 1)
    # EUP approximate reciprocal (free bundle slot) + one Newton refinement
    # (2 cheap VPU ops on a (TB, 1) vector) to preserve full f32 accuracy.
    r = pl.reciprocal(denom, approx=True)
    r = r * (2.0 - denom * r)
    p = e * r                                                   # (TB, S)

    # context[b, :] = sum_s p[b, s] * x[b, s, :]. Re-read x from the VMEM block
    # (free) instead of holding it live since the matmul; upcast to f32 for the
    # weighted sum so the bf16-activation path also works on v5e (no bf16 VPU).
    xw = x_ref[...].astype(jnp.float32)                         # (TB, S, H)
    o_ref[...] = jnp.sum(xw * p[:, :, None], axis=1).astype(o_ref.dtype)


def _pick_batch_block(B, S, H, x_bytes, vmem_budget):
    """Batch rows per grid step: ~1 MiB of x per step (amortizes per-step
    pipeline overhead), capped by a conservative VMEM budget (sized for v7x's
    64 MiB) counting the double-buffered x block plus ~4x f32 temps, and split
    into >=2 parallel steps at large B so both v7x TensorCores get work."""
    row_bytes = S * H * x_bytes
    vmem_row_bytes = 2 * S * H * x_bytes + 4 * S * H * 4
    tb = (1 << 20) // max(1, row_bytes)
    tb = min(tb, (2 * vmem_budget // 5) // max(1, vmem_row_bytes))
    tb = max(8, min(1024, (tb // 8) * 8))
    if B >= 256:  # only trade tile size for grid length when tiles stay large
        tb = min(tb, ((B + 1) // 2 + 7) // 8 * 8)
    return B if B <= tb else tb


def attention_forward(lstm_output, attn_weight, attn_bias, v, *,
                      batch_block=None, activation_dtype=None):
    """lstm_output: (B, S, H); attn_weight: torch-layout (H_out, H_in);
    attn_bias: (H,); v: (H,). Returns context vectors (B, H) in f32.

    activation_dtype=jnp.bfloat16 halves the dominant HBM stream (big win on
    v5e/v6e) but will not meet a 1e-5 check against an f32 reference."""
    B, S, H = lstm_output.shape
    x = lstm_output if activation_dtype is None else lstm_output.astype(activation_dtype)
    x_bytes = x.dtype.itemsize
    vmem_budget = 48 * 1024 * 1024      # safe ceiling on v5e/v6e/v7x (64 MiB)

    if batch_block is None:
        batch_block = _pick_batch_block(B, S, H, x_bytes, vmem_budget)
    tb = min(B, batch_block)
    if tb < B and tb % 8 != 0:          # sublane-aligned blocks when tiling B
        tb = max(8, (tb // 8) * 8)
        if tb >= B:
            tb = B

    w = attn_weight.astype(x.dtype)     # keep (out, in) layout; match MXU dtype
    b2 = attn_bias.reshape(1, H).astype(jnp.float32)
    v2 = v.reshape(1, H).astype(jnp.float32)

    # Invariant blocks: constant index maps -> fetched once. At production H,
    # single-buffer them so the H^2 weight does not pay a 2x double-buffer copy
    # inside v7x's 64 MiB VMEM. Irrelevant (8 KB) at H=32, so leave defaults.
    if H >= 512:
        w_spec = pl.BlockSpec((H, H), lambda i: (0, 0), pipeline_mode=pl.Buffered(1))
        b_spec = pl.BlockSpec((1, H), lambda i: (0, 0), pipeline_mode=pl.Buffered(1))
        v_spec = pl.BlockSpec((1, H), lambda i: (0, 0), pipeline_mode=pl.Buffered(1))
    else:
        w_spec = pl.BlockSpec((H, H), lambda i: (0, 0))
        b_spec = pl.BlockSpec((1, H), lambda i: (0, 0))
        v_spec = pl.BlockSpec((1, H), lambda i: (0, 0))

    cost = pl.CostEstimate(
        flops=2 * B * S * H * (H + 2),              # linear + v-dot + weighted sum
        transcendentals=B * S * (H + 1),            # tanh + exp
        bytes_accessed=B * S * H * x_bytes + H * H * x_bytes + 2 * H * 4 + B * H * 4,
    )

    return pl.pallas_call(
        attention_kernel,
        out_shape=jax.ShapeDtypeStruct((B, H), jnp.float32),
        grid_spec=pltpu.PrefetchScalarGridSpec(
            num_scalar_prefetch=0,
            grid=(pl.cdiv(B, tb),),
            in_specs=[
                pl.BlockSpec((tb, S, H), lambda i: (i, 0, 0)),
                w_spec, b_spec, v_spec,
            ],
            out_specs=pl.BlockSpec((tb, H), lambda i: (i, 0)),
        ),
        compiler_params=pltpu.CompilerParams(
            dimension_semantics=("parallel",),      # shards steps across v7x TCs
            vmem_limit_bytes=vmem_budget,
        ),
        cost_estimate=cost,
    )(x, w, b2, v2)


def attention_reference(x, w, b, v):
    # Pure-JAX reference mirroring the PyTorch forward exactly.
    aw = jnp.tanh(jnp.einsum("bsh,oh->bso", x, w) + b)      # Linear: x @ W^T + b
    aw = jnp.einsum("bsh,h->bs", aw, v)
    aw = jax.nn.softmax(aw, axis=1)[..., None]              # (B, S, 1)
    return jnp.sum(x * aw, axis=1)                          # (B, H)


if __name__ == "__main__":
    S, H = 8, 32
    key = jax.random.PRNGKey(0)
    k_x, k_w, k_b, k_v = jax.random.split(key, 4)

    # Deterministic params (shapes from nn.Linear(H, H) and Parameter(rand(H)))
    attn_weight = jax.random.uniform(k_w, (H, H), minval=-0.1, maxval=0.1,
                                     dtype=jnp.float32)      # torch layout (out, in)
    attn_bias = jax.random.uniform(k_b, (H,), minval=-0.1, maxval=0.1,
                                   dtype=jnp.float32)
    v_param = jax.random.uniform(k_v, (H,), dtype=jnp.float32)

    # Primary small-shape check: B=2 (single grid step, full-array block).
    B = 2
    lstm_output = jax.random.normal(k_x, (B, S, H), dtype=jnp.float32)
    out = jax.block_until_ready(
        attention_forward(lstm_output, attn_weight, attn_bias, v_param))
    ref = attention_reference(lstm_output, attn_weight, attn_bias, v_param)
    assert out.shape == (B, H)
    assert jnp.allclose(out, ref, atol=1e-5, rtol=1e-5)

    # Secondary checks: multi-step "parallel" grid (B=64, tb=32) and a padded
    # last block (B=100, tb=48) -- padded rows are computed but never stored.
    for Bx, bb in ((64, 32), (100, 48)):
        xb = jax.random.normal(jax.random.fold_in(k_x, Bx), (Bx, S, H),
                               dtype=jnp.float32)
        outb = jax.block_until_ready(
            attention_forward(xb, attn_weight, attn_bias, v_param, batch_block=bb))
        refb = attention_reference(xb, attn_weight, attn_bias, v_param)
        assert outb.shape == (Bx, H)
        assert jnp.allclose(outb, refb, atol=1e-5, rtol=1e-5)

    print("KERNEL_OK")
</pallas_src>

<mosaic_0001>
module attributes {stable_mosaic.version = 11 : i64} {
  func.func @attention_kernel(%arg0: i32, %arg1: memref<2x8x32xf32, #tpu.memory_space<vmem>>, %arg2: memref<32x32xf32, #tpu.memory_space<vmem>>, %arg3: memref<1x32xf32, #tpu.memory_space<vmem>>, %arg4: memref<1x32xf32, #tpu.memory_space<vmem>>, %arg5: memref<2x32xf32, #tpu.memory_space<vmem>>) attributes {dimension_semantics = [#tpu.dimension_semantics<parallel>], iteration_bounds = array<i64: 1>, scalar_prefetch = 0 : i64, scratch_operands = 0 : i64, tpu.core_type = #tpu.core_type<tc>, window_params = [{transform_indices = @transform_0, window_bounds = array<i64: 2, 8, 32>}, {pipeline_mode = #tpu.pipeline_mode<synchronous>, transform_indices = @transform_1, window_bounds = array<i64: 32, 32>}, {pipeline_mode = #tpu.pipeline_mode<synchronous>, transform_indices = @transform_2, window_bounds = array<i64: 1, 32>}, {pipeline_mode = #tpu.pipeline_mode<synchronous>, transform_indices = @transform_3, window_bounds = array<i64: 1, 32>}, {transform_indices = @transform_4, window_bounds = array<i64: 2, 32>}]} {
    %c0 = arith.constant 0 : index
    %c0_0 = arith.constant 0 : index
    %c0_1 = arith.constant 0 : index
    %0 = vector.load %arg1[%c0, %c0_0, %c0_1] : memref<2x8x32xf32, #tpu.memory_space<vmem>>, vector<2x8x32xf32>
    %1 = vector.shape_cast %0 : vector<2x8x32xf32> to vector<16x32xf32>
    %c0_2 = arith.constant 0 : index
    %c0_3 = arith.constant 0 : index
    %2 = vector.load %arg2[%c0_2, %c0_3] : memref<32x32xf32, #tpu.memory_space<vmem>>, vector<32x32xf32>
    %cst = arith.constant dense<0.000000e+00> : vector<16x32xf32>
    %3 = tpu.matmul %1, %2, %cst {dimension_numbers = #tpu.dot_dimension_numbers<[1], [1], [0], [0], [0, 0, 1, 0], [], []>} : vector<16x32xf32>, vector<32x32xf32>, vector<16x32xf32> -> vector<16x32xf32>
    %c0_4 = arith.constant 0 : index
    %c0_5 = arith.constant 0 : index
    %4 = vector.load %arg3[%c0_4, %c0_5] : memref<1x32xf32, #tpu.memory_space<vmem>>, vector<1x32xf32>
    %5 = vector.broadcast %4 : vector<1x32xf32> to vector<16x32xf32>
    %6 = arith.addf %3, %5 : vector<16x32xf32>
    %7 = math.tanh %6 : vector<16x32xf32>
    %8 = vector.shape_cast %7 : vector<16x32xf32> to vector<2x8x32xf32>
    %c0_6 = arith.constant 0 : index
    %c0_7 = arith.constant 0 : index
    %9 = vector.load %arg4[%c0_6, %c0_7] : memref<1x32xf32, #tpu.memory_space<vmem>>, vector<1x32xf32>
    %10 = vector.shape_cast %9 : vector<1x32xf32> to vector<1x1x32xf32>
    %11 = vector.broadcast %10 : vector<1x1x32xf32> to vector<2x8x32xf32>
    %12 = arith.mulf %8, %11 : vector<2x8x32xf32>
    %cst_8 = arith.constant dense<0.000000e+00> : vector<2x8xf32>
    %13 = vector.multi_reduction <add>, %12, %cst_8 [2] : vector<2x8x32xf32> to vector<2x8xf32>
    %cst_9 = arith.constant dense<0xFF800000> : vector<2xf32>
    %14 = vector.multi_reduction <maximumf>, %13, %cst_9 [1] : vector<2x8xf32> to vector<2xf32>
    %15 = vector.shape_cast %14 : vector<2xf32> to vector<2x1xf32>
    %16 = vector.broadcast %15 : vector<2x1xf32> to vector<2x8xf32>
    %17 = arith.subf %13, %16 : vector<2x8xf32>
    %18 = math.exp %17 : vector<2x8xf32>
    %cst_10 = arith.constant dense<0.000000e+00> : vector<2xf32>
    %19 = vector.multi_reduction <add>, %18, %cst_10 [1] : vector<2x8xf32> to vector<2xf32>
    %20 = vector.shape_cast %19 : vector<2xf32> to vector<2x1xf32>
    %21 = tpu.reciprocal %20 {approx = true} : vector<2x1xf32> -> vector<2x1xf32>
    %22 = arith.mulf %20, %21 : vector<2x1xf32>
    %cst_11 = arith.constant 2.000000e+00 : f32
    %23 = vector.broadcast %cst_11 : f32 to vector<2x1xf32>
    %24 = arith.subf %23, %22 : vector<2x1xf32>
    %25 = arith.mulf %21, %24 : vector<2x1xf32>
    %26 = vector.broadcast %25 : vector<2x1xf32> to vector<2x8xf32>
    %27 = arith.mulf %18, %26 : vector<2x8xf32>
    %c0_12 = arith.constant 0 : index
    %c0_13 = arith.constant 0 : index
    %c0_14 = arith.constant 0 : index
    %28 = vector.load %arg1[%c0_12, %c0_13, %c0_14] : memref<2x8x32xf32, #tpu.memory_space<vmem>>, vector<2x8x32xf32>
    %29 = vector.shape_cast %27 : vector<2x8xf32> to vector<2x8x1xf32>
    %30 = vector.broadcast %29 : vector<2x8x1xf32> to vector<2x8x32xf32>
    %31 = arith.mulf %28, %30 : vector<2x8x32xf32>
    %cst_15 = arith.constant dense<0.000000e+00> : vector<2x32xf32>
    %32 = vector.multi_reduction <add>, %31, %cst_15 [1] : vector<2x8x32xf32> to vector<2x32xf32>
    %c0_16 = arith.constant 0 : index
    %c0_17 = arith.constant 0 : index
    %33 = vector.load %arg5[%c0_16, %c0_17] : memref<2x32xf32, #tpu.memory_space<vmem>>, vector<2x32xf32>
    tpu.vector_store %arg5[%c0_16, %c0_17], %32 {strides = array<i32>} : memref<2x32xf32, #tpu.memory_space<vmem>>, vector<2x32xf32>,
    return
  }
  func.func @transform_0(%arg0: i32) -> (i32, i32, i32) {
    %c0_i32 = arith.constant 0 : i32
    %c0_i32_0 = arith.constant 0 : i32
    %c0_i32_1 = arith.constant 0 : i32
    return %arg0, %c0_i32, %c0_i32_0 : i32, i32, i32
  }
  func.func @transform_1(%arg0: i32) -> (i32, i32) {
    %c0_i32 = arith.constant 0 : i32
    %c0_i32_0 = arith.constant 0 : i32
    %c0_i32_1 = arith.constant 0 : i32
    return %c0_i32, %c0_i32_0 : i32, i32
  }
  func.func @transform_2(%arg0: i32) -> (i32, i32) {
    %c0_i32 = arith.constant 0 : i32
    %c0_i32_0 = arith.constant 0 : i32
    %c0_i32_1 = arith.constant 0 : i32
    return %c0_i32, %c0_i32_0 : i32, i32
  }
  func.func @transform_3(%arg0: i32) -> (i32, i32) {
    %c0_i32 = arith.constant 0 : i32
    %c0_i32_0 = arith.constant 0 : i32
    %c0_i32_1 = arith.constant 0 : i32
    return %c0_i32, %c0_i32_0 : i32, i32
  }
  func.func @transform_4(%arg0: i32) -> (i32, i32) {
    %c0_i32 = arith.constant 0 : i32
    %c0_i32_0 = arith.constant 0 : i32
    return %arg0, %c0_i32 : i32, i32
  }
}

</mosaic_0001>

<llo_original>
// kernel: tpu_custom_call.1
$region0: #{tpu_custom_call.1}
  #allocation0 [shape = 'u32[]', space=smem, size = 0x4, offset = 0x4, fixed_abs, tag = 'smem constant byte address 0x4 - core index']
  #allocation1 [shape = 'u32[144,128]{1,0:T(1,128)}', space=vmem, size = 0x12000, scoped, tag = 'internal scratch']
  %s0 = inlined_call_operand.hbm [shape: f32[2,8,32], index: 0, kind: input, shape index: {}]
  %s1 = inlined_call_operand.hbm [shape: f32[32,32], index: 1, kind: input, shape index: {}]
  %s2 = inlined_call_operand.vmem [shape: f32[1,32], index: 2, kind: input, shape index: {}]
  %s3 = inlined_call_operand.vmem [shape: f32[1,32], index: 3, kind: input, shape index: {}]
  %s4 = inlined_call_operand.hbm [shape: f32[2,32], index: 4, kind: output, shape index: {}]
  %s5 = sld [smem:[#allocation0]]
  $region34: #{tpu_custom_call.1} parent=0
    _
  %s7 = ssub.s32 1, %s5
  %s8 = scalar_select 0, %s7, %s5
  $region1: #{tpu_custom_call.1} parent=0
    #allocation2 [shape = 'u8[8192]{0}', space=vmem, size = 0x2000, scoped, tag = 'input window, operand 0, single buffered']
    #allocation3 [shape = 's32[1]{0}', space=sflag, size = 0x4, scoped, tag = 'scoped memory for tpu_custom_call.1']
    #allocation4 [shape = 's32[1]{0}', space=sflag, size = 0x4, scoped, tag = 'scoped memory for tpu_custom_call.1']
    #allocation5 [shape = 'u8[16384]{0}', space=vmem, size = 0x4000, scoped, tag = 'input window, operand 1, single buffered']
    #allocation6 [shape = 's32[1]{0}', space=sflag, size = 0x4, scoped, tag = 'scoped memory for tpu_custom_call.1']
    #allocation7 [shape = 'u8[1024]{0}', space=vmem, size = 0x400, scoped, tag = 'output window, operand 0, single buffered']
    %9 = vsyncpa [#allocation3], 0
    %10 = vsyncpa [#allocation6], 0
    %11 = vsyncpa [#allocation4], 0
    // Predicated region
    $region2: #{tpu_custom_call.1} parent=1 // pred_check
      _
    $region3: #{tpu_custom_call.1} parent=1 // pred_check_branch
      %13 = sbr.rel (0) target = $region5
    $region4: #{tpu_custom_call.1} parent=1 // pred_region
      %s15 = ssub.s32 256, 256
      %16 = vsyncadd [#allocation3], %s15
      %s17 = sshll.u32 [#allocation2], 4
      %s18 = int_to_ptr.vmem [resolvable:$true] %s17
      %23 = dma.hbm_to_vmem [thread:$0]  %s0, 256, %s18, [#allocation3], 128, 128, 8
    $region5: #{tpu_custom_call.1} parent=1 // pred_fallthru
      _
    // Predicated region
    $region6: #{tpu_custom_call.1} parent=1 // pred_check
      _
    $region7: #{tpu_custom_call.1} parent=1 // pred_check_branch
      %25 = sbr.rel (0) target = $region9
    $region8: #{tpu_custom_call.1} parent=1 // pred_region
      %s27 = ssub.s32 512, 512
      %28 = vsyncadd [#allocation6], %s27
      %s29 = sshll.u32 [#allocation5], 4
      %s30 = int_to_ptr.vmem [resolvable:$true] %s29
      %35 = dma.hbm_to_vmem [thread:$0]  %s1, 512, %s30, [#allocation6], 128, 128, 8
    $region9: #{tpu_custom_call.1} parent=1 // pred_fallthru
      _
    // Predicated region
    $region10: #{tpu_custom_call.1} parent=1 // pred_check
      _
    $region11: #{tpu_custom_call.1} parent=1 // pred_check_branch
      %37 = sbr.rel (0) target = $region13
    $region12: #{tpu_custom_call.1} parent=1 // pred_region
      _
    $region13: #{tpu_custom_call.1} parent=1 // pred_fallthru
      _
    // Predicated region
    $region14: #{tpu_custom_call.1} parent=1 // pred_check
      _
    $region15: #{tpu_custom_call.1} parent=1 // pred_check_branch
      %39 = sbr.rel (0) target = $region17
    $region16: #{tpu_custom_call.1} parent=1 // pred_region
      _
    $region17: #{tpu_custom_call.1} parent=1 // pred_fallthru
      _
    // Predicated region
    $region18: #{tpu_custom_call.1} parent=1 // pred_check
      _
    $region19: #{tpu_custom_call.1} parent=1 // pred_check_branch
      %41 = sbr.rel (0) target = $region21
    $region20: #{tpu_custom_call.1} parent=1 // pred_region
      %42 = dma.done [#allocation3], 256
    $region21: #{tpu_custom_call.1} parent=1 // pred_fallthru
      _
    // Predicated region
    $region22: #{tpu_custom_call.1} parent=1 // pred_check
      _
    $region23: #{tpu_custom_call.1} parent=1 // pred_check_branch
      %44 = sbr.rel (0) target = $region25
    $region24: #{tpu_custom_call.1} parent=1 // pred_region
      %45 = dma.done [#allocation6], 512
    $region25: #{tpu_custom_call.1} parent=1 // pred_fallthru
      _
    %v46 = vld [vmem:[#allocation2] sm:$0xff]
    %v47 = vld [vmem:[#allocation2 + $0x8] sm:$0xff]
    %v48 = vld [vmem:[#allocation5] sm:$0xff]
    %v49 = vld [vmem:[#allocation5 + $0x8] sm:$0xff]
    %v50 = vld [vmem:[#allocation5 + $0x10] sm:$0xff]
    %v51 = vld [vmem:[#allocation5 + $0x18] sm:$0xff]
    %v52 = vld [vmem:[%s2] sm:$0x1]
    %v54 = vlaneseq
    %v55 = vshrl.u32 %v54, 7
    %v56 = vsub.s32 0, %v55
    %v57 = vrot.slane %v52, %v56
    %vm59 = vcmask 261120
    %v61 = vsel %vm59, %v46, 0
    %v64 = vsel %vm59, %v47, 0
    %v67 = vsel %vm59, %v48, 0
    %v70 = vsel %vm59, %v49, 0
    %v73 = vsel %vm59, %v50, 0
    %v76 = vsel %vm59, %v51, 0
    %78 = vmatprep.subr.mxu0 0.0
    %79 = vmatpush1.xpose.msra.mxu0 0.0
    %80 = vmatprep.subr.mxu0 0.0
    %81 = vmatpush1.xpose.msra.mxu0 0.0
    %82 = vmatprep.subr.mxu0 0.0
    %83 = vmatpush1.xpose.msra.mxu0 0.0
    %84 = vmatprep.subr.mxu0 0.0
    %85 = vmatpush1.xpose.msra.mxu0 0.0
    %86 = vmatprep.subr.mxu0 0.0
    %87 = vmatpush1.xpose.msra.mxu0 0.0
    %88 = vmatprep.subr.mxu0 0.0
    %89 = vmatpush1.xpose.msra.mxu0 0.0
    %90 = vmatprep.subr.mxu0 0.0
    %91 = vmatpush1.xpose.msra.mxu0 0.0
    %92 = vmatprep.subr.mxu0 0.0
    %93 = vmatpush1.xpose.msra.mxu0 0.0
    %94 = vmatprep.subr.mxu0 0.0
    %95 = vmatpush1.xpose.msra.mxu0 0.0
    %96 = vmatprep.subr.mxu0 0.0
    %97 = vmatpush1.xpose.msra.mxu0 0.0
    %98 = vmatprep.subr.mxu0 0.0
    %99 = vmatpush1.xpose.msra.mxu0 0.0
    %100 = vmatprep.subr.mxu0 0.0
    %101 = vmatpush1.xpose.msra.mxu0 0.0
    %102 = vmatprep.subr.mxu0 0.0
    %103 = vmatpush1.xpose.msra.mxu0 %v76
    %104 = vmatprep.subr.mxu0 0.0
    %105 = vmatpush1.xpose.msra.mxu0 %v73
    %106 = vmatprep.subr.mxu0 0.0
    %107 = vmatpush1.xpose.msra.mxu0 %v70
    %108 = vmatprep.subr.mxu0 0.0
    %109 = vmatpush1.xpose.msra.mxu0 %v67
    %110 = vmatprep.subr.mxu0 0.0
    %111 = vmatpush2.xpose.msra.mxu0 0.0
    %112 = vmatprep.subr.mxu0 0.0
    %113 = vmatpush2.xpose.msra.mxu0 0.0
    %114 = vmatprep.subr.mxu0 0.0
    %115 = vmatpush2.xpose.msra.mxu0 0.0
    %116 = vmatprep.subr.mxu0 0.0
    %117 = vmatpush2.xpose.msra.mxu0 0.0
    %118 = vmatprep.subr.mxu0 0.0
    %119 = vmatpush2.xpose.msra.mxu0 0.0
    %120 = vmatprep.subr.mxu0 0.0
    %121 = vmatpush2.xpose.msra.mxu0 0.0
    %122 = vmatprep.subr.mxu0 0.0
    %123 = vmatpush2.xpose.msra.mxu0 0.0
    %124 = vmatprep.subr.mxu0 0.0
    %125 = vmatpush2.xpose.msra.mxu0 0.0
    %126 = vmatprep.subr.mxu0 0.0
    %127 = vmatpush2.xpose.msra.mxu0 0.0
    %128 = vmatprep.subr.mxu0 0.0
    %129 = vmatpush2.xpose.msra.mxu0 0.0
    %130 = vmatprep.subr.mxu0 0.0
    %131 = vmatpush2.xpose.msra.mxu0 0.0
    %132 = vmatprep.subr.mxu0 0.0
    %133 = vmatpush2.xpose.msra.mxu0 0.0
    %134 = vmatprep.subr.mxu0 0.0
    %135 = vmatpush2.xpose.msra.mxu0 0.0
    %136 = vmatprep.subr.mxu0 0.0
    %137 = vmatpush2.xpose.msra.mxu0 0.0
    %138 = vmatprep.subr.mxu0 0.0
    %139 = vmatpush2.xpose.msra.mxu0 0.0
    %140 = vmatprep.subr.mxu0 0.0
    %141 = vmatpush2.xpose.msra.mxu0 0.0
    %142 = vmatprep.mubr.f32.mxu0 0.0
    %143 = vmatmul.mubr.f32.gmra.mxu0 %v61
    %v144 = vpop.f32.mrf.mxu0
    %v145 = vadd.f32 %v57, %v144
    %v146 = vpop.f32.mrf.mxu0
    %147 = vmatprep.mubr.f32.mxu0 0.0
    %148 = vmatmul.mubr.f32.gmra.mxu0 %v64
    %v149 = vpop.f32.mrf.mxu0
    %v150 = vadd.f32 %v57, %v149
    %v151 = vpop.f32.mrf.mxu0
    %152 = vdwg.mxu0
    %v153 = vtanh.pop %v145
    %v154 = vtanh.pop %v150
    %v155 = vld [vmem:[%s3] sm:$0x1]
    %v157 = vlaneseq
    %v158 = vshrl.u32 %v157, 7
    %v159 = vsub.s32 0, %v158
    %v160 = vrot.slane %v155, %v159
    %v162 = vmul.f32 %v153, %v160
    %v163 = vmul.f32 %v154, %v160
    %v164 = vsel %vm59, %v162, 0.0
    %165 = vadd.xlane.f32.xlu0 %v164
    %v166 = vpop.xlane.xlu0 %165
    %v167 = vsel %vm59, %v163, 0.0
    %168 = vadd.xlane.f32.xlu0 %v167
    %v169 = vpop.xlane.xlu0 %168
    %v172 = vlaneseq
    %v173 = vand.u32 %v172, 127
    %v174 = vlaneseq
    %v175 = vshrl.u32 %v174, 7
    %v176 = vsub.s32 %v173, %v175
    %v177 = vrot.slane %v166, %v176
    %v178 = vlaneseq
    %v179 = vshrl.u32 %v178, 7
    %v180 = vsub.s32 %v173, %v179
    %v181 = vrot.slane %v169, %v180
    %vm182 = vcmask 1041409
    %v183 = vsel %vm182, %v181, %v177
    %vm185 = vcmask 58368
    %v186 = vsel %vm185, %v183, -inf
    %187 = vmax.xlane.f32.xlu0 %v186
    %v188 = vpop.xlane.xlu0 %187
    %v190 = vlaneseq
    %v191 = vshrl.u32 %v190, 7
    %v192 = vsub.s32 0, %v191
    %v193 = vrot.slane %v188, %v192
    %v194 = vlaneseq
    %v195 = vshrl.u32 %v194, 7
    %v196 = vsub.s32 1, %v195
    %v197 = vrot.slane %v188, %v196
    %v200 = vsub.f32 %v166, %v193
    %v201 = vsub.f32 %v169, %v197
    %v202 = vmul.f32 %v200, 1.442695
    %v203 = vpow.pop %v202
    %v204 = vmul.f32 %v201, 1.442695
    %v205 = vpow.pop %v204
    %208 = vset.pattern.permute.xlu0 0
    %209 = vperm.xlu0 %208, %v203
    %v210 = vpop.permute.xlu0 %209
    %211 = vset.pattern.permute.xlu0 0
    %212 = vperm.xlu0 %211, %v205
    %v213 = vpop.permute.xlu0 %212
    %v214 = vlaneseq
    %v215 = vshrl.u32 %v214, 7
    %v216 = vsub.s32 %v173, %v215
    %v217 = vrot.slane %v210, %v216
    %v218 = vlaneseq
    %v219 = vshrl.u32 %v218, 7
    %v220 = vsub.s32 %v173, %v219
    %v221 = vrot.slane %v213, %v220
    %v222 = vsel %vm182, %v221, %v217
    %v224 = vsel %vm185, %v222, 0.0
    %225 = vadd.xlane.f32.xlu0 %v224
    %v226 = vpop.xlane.xlu0 %225
    %v227 = vrcp.pop %v226
    %v228 = vmul.f32 %v226, %v227
    %v229 = vsub.f32 2.0, %v228
    %v230 = vmul.f32 %v227, %v229
    %v232 = vlaneseq
    %v233 = vshrl.u32 %v232, 7
    %v234 = vsub.s32 0, %v233
    %v235 = vrot.slane %v230, %v234
    %v236 = vlaneseq
    %v237 = vshrl.u32 %v236, 7
    %v238 = vsub.s32 1, %v237
    %v239 = vrot.slane %v230, %v238
    %v242 = vmul.f32 %v203, %v235
    %v243 = vmul.f32 %v205, %v239
    %245 = vset.pattern.permute.xlu0 0
    %246 = vperm.xlu0 %245, %v242
    %v247 = vpop.permute.xlu0 %246
    %250 = vset.pattern.permute.xlu0 0
    %251 = vperm.xlu0 %250, %v243
    %v252 = vpop.permute.xlu0 %251
    %v254 = vmul.f32 %v46, %v247
    %v255 = vmul.f32 %v47, %v252
    %v256 = vsel %vm59, %v254, 0.0
    %v257 = vrot.slane %v256, 4
    %v258 = vadd.f32 %v256, %v257
    %v259 = vrot.slane %v258, 2
    %v260 = vadd.f32 %v258, %v259
    %v261 = vrot.slane %v260, 1
    %v262 = vadd.f32 %v260, %v261
    %v263 = vsel %vm59, %v255, 0.0
    %v264 = vrot.slane %v263, 4
    %v265 = vadd.f32 %v263, %v264
    %v266 = vrot.slane %v265, 2
    %v267 = vadd.f32 %v265, %v266
    %v268 = vrot.slane %v267, 1
    %v269 = vadd.f32 %v267, %v268
    %v272 = vsel %vm182, %v269, %v262
    %vm274 = vcmask 254976
    %275 = vst.msk [vmem:[#allocation7] sm:$0x3] %vm274, %v272
    // Predicated region
    $region26: #{tpu_custom_call.1} parent=1 // pred_check
      _
    $region27: #{tpu_custom_call.1} parent=1 // pred_check_branch
      %277 = sbr.rel (0) target = $region29
    $region28: #{tpu_custom_call.1} parent=1 // pred_region
      %s279 = ssub.s32 32, 32
      %280 = vsyncadd [#allocation4], %s279
      %s282 = sshll.u32 [#allocation7], 4
      %s283 = int_to_ptr.vmem [resolvable:$true] %s282
      %285 = dma.vmem_to_hbm [thread:$0]  %s283, 32, %s4, [#allocation4]
    $region29: #{tpu_custom_call.1} parent=1 // pred_fallthru
      _
    // Predicated region
    $region30: #{tpu_custom_call.1} parent=1 // pred_check
      _
    $region31: #{tpu_custom_call.1} parent=1 // pred_check_branch
      %287 = sbr.rel (0) target = $region33
    $region32: #{tpu_custom_call.1} parent=1 // pred_region
      %288 = dma.done [#allocation4], 32
    $region33: #{tpu_custom_call.1} parent=1 // pred_fallthru
      _
    %289 = vsyncpa [#allocation3], 1
    %290 = vsyncpa [#allocation6], 1
    %291 = vsyncpa [#allocation4], 1

</llo_original>
